<compile_context>
chip_gen: v7x
topology: tpu7x:2x2x1
jax: 0.10.0
libtpu: 0.0.40
codegen_flags: <defaults>
</compile_context>

<pallas_src>
import jax
import jax.numpy as jnp
from jax.experimental import pallas as pl
from jax.experimental.pallas import tpu as pltpu


def gcn_kernel(x_ref, a_ref, w_ref, b_ref, pool_ref, w1_ref, b1_ref, w2_ref, b2_ref, o_ref):
    """One grid step == BG SEAL subgraphs packed block-diagonally, all VMEM-resident.

    x_ref   : [1, BG*N, H]      bf16  z-embedding activations (gathered in the wrapper)
    a_ref   : [1, BG*N, BG*N]   bf16  block-diagonal normalized adjacency A_hat
    w_ref   : [L, H, H]         bf16  stacked GraphConv weights   (constant index map)
    b_ref   : [L, 1, H]         f32   stacked GraphConv biases    (constant index map)
    pool_ref: [BG, BG*N]        f32   per-graph sum-pooling matrix
    w1_ref  : [H, H], b1_ref: [1, H]  linear_1 (f32)
    w2_ref  : [H, 1], b2_ref: [1, 1]  linear_2 (f32)
    o_ref   : [BG, 128]         f32   lane-dense output tile (per-graph scalar broadcast)
    """
    num_layers = w_ref.shape[0]

    a = a_ref[0]                                                  # [BG*N, BG*N] bf16
    x = x_ref[0]                                                  # [BG*N, H]    bf16

    h = None
    for l in range(num_layers):                                   # static unrolled loop
        agg = jnp.dot(a, x, preferred_element_type=jnp.float32)   # A_hat @ x (one MXU pass)
        h = jnp.dot(agg.astype(jnp.bfloat16), w_ref[l],
                    preferred_element_type=jnp.float32) + b_ref[l]
        if l < num_layers - 1:
            h = jnp.maximum(h, 0.0)                               # ReLU; dropout = identity (eval)
            x = h.astype(jnp.bfloat16)

    # SumPooling per graph as a tiny MXU matmul: [BG, BG*N] @ [BG*N, H] -> [BG, H]
    pooled = jnp.dot(pool_ref[...], h, preferred_element_type=jnp.float32)

    # Batched tail MLP over the BG graphs in this step.
    h1 = jnp.dot(pooled, w1_ref[...], preferred_element_type=jnp.float32) + b1_ref[...]
    h1 = jnp.maximum(h1, 0.0)                                     # relu(linear_1(x))
    out = jnp.dot(h1, w2_ref[...], preferred_element_type=jnp.float32) + b2_ref[...]  # [BG, 1]

    # Lane-dense store: per-graph scalars broadcast over 128 lanes (unmasked vst).
    o_ref[...] = jnp.broadcast_to(out, o_ref.shape)


def gcn_forward(z_b, a_hat_b, z_table, w_stack, b_stack, w1, b1, w2, b2, *, bg=8):
    """z_b: [B, N, 1] int32, a_hat_b: [B, N, N] bf16.  Returns [B, 1] f32."""
    B, N, _ = a_hat_b.shape
    MAX_Z, H = z_table.shape
    L = w_stack.shape[0]
    assert B % bg == 0, "batch must be a multiple of the super-block size"
    G = B // bg
    M = bg * N                                                    # rows per super-block

    # --- embedding gather hoisted out of the kernel (plain XLA gather) ---
    # TODO(synk): nn.Embedding raises on out-of-range z; jnp.take clamps instead.
    x = jnp.take(z_table, z_b[:, :, 0], axis=0)                   # [B, N, H] bf16
    x = x.reshape(G, M, H)

    # --- block-diagonal A_hat super-blocks: [G, M, M] ---
    eye = jnp.eye(bg, dtype=a_hat_b.dtype)
    a_bd = jnp.einsum('gbij,bc->gbicj',
                      a_hat_b.reshape(G, bg, N, N), eye).reshape(G, M, M)

    # --- per-graph sum-pooling matrix: pool[g, g*N:(g+1)*N] = 1 ---
    pool = (jnp.arange(M)[None, :] // N ==
            jnp.arange(bg)[:, None]).astype(jnp.float32)          # [bg, M]

    flops_per_step = (L * (2 * M * M * H + 2 * M * H * H)         # GraphConv layers
                      + 2 * bg * M * H                            # sum pooling matmul
                      + 2 * bg * H * H + 2 * bg * H)              # linear_1 / linear_2
    bytes_accessed = (x.size * 2 + a_bd.size * 2 + pool.size * 4
                      + w_stack.size * 2 + b_stack.size * 4
                      + w1.size * 4 + b1.size * 4 + w2.size * 4 + b2.size * 4
                      + B * 128 * 4)

    out = pl.pallas_call(
        gcn_kernel,
        out_shape=jax.ShapeDtypeStruct((B, 128), jnp.float32),
        grid=(G,),
        in_specs=[
            pl.BlockSpec((1, M, H), lambda g: (g, 0, 0)),         # x super-block
            pl.BlockSpec((1, M, M), lambda g: (g, 0, 0)),         # block-diag A_hat
            pl.BlockSpec((L, H, H), lambda g: (0, 0, 0)),         # GraphConv weights (resident)
            pl.BlockSpec((L, 1, H), lambda g: (0, 0, 0)),         # GraphConv biases (resident)
            pl.BlockSpec((bg, M), lambda g: (0, 0)),              # pooling matrix (resident)
            pl.BlockSpec((H, H), lambda g: (0, 0)),               # linear_1 W
            pl.BlockSpec((1, H), lambda g: (0, 0)),               # linear_1 b
            pl.BlockSpec((H, 1), lambda g: (0, 0)),               # linear_2 W
            pl.BlockSpec((1, 1), lambda g: (0, 0)),               # linear_2 b
        ],
        out_specs=pl.BlockSpec((bg, 128), lambda g: (g, 0)),      # lane-dense [BG, 128] tile
        compiler_params=pltpu.CompilerParams(
            dimension_semantics=("parallel",)),                   # >=2 steps -> both TCs on v7x
        cost_estimate=pl.CostEstimate(
            flops=int(G * flops_per_step),
            transcendentals=0,
            bytes_accessed=int(bytes_accessed)),
    )(x, a_bd, w_stack, b_stack, pool, w1, b1, w2, b2)
    return out[:, :1]                                             # [B, 1]


def reference_forward(z_b, a_hat_b, z_table, w_stack, b_stack, w1, b1, w2, b2):
    """Pure-JAX reference mirroring the kernel's bf16 rounding points."""
    B, N, _ = a_hat_b.shape
    H = z_table.shape[1]
    L = w_stack.shape[0]
    zt = z_table.astype(jnp.float32)
    outs = []
    for i in range(B):
        x = zt[z_b[i, :, 0]]                                      # bf16 values upcast to f32
        a = a_hat_b[i].astype(jnp.float32)
        h = None
        for l in range(L):
            agg = a @ x
            h = (agg.astype(jnp.bfloat16).astype(jnp.float32)
                 @ w_stack[l].astype(jnp.float32) + b_stack[l])
            if l < L - 1:
                h = jnp.maximum(h, 0.0)
                x = h.astype(jnp.bfloat16).astype(jnp.float32)
        pooled = jnp.sum(h, axis=0, keepdims=True)
        h1 = jnp.maximum(pooled @ w1 + b1, 0.0)
        outs.append(h1 @ w2 + b2)
    return jnp.concatenate(outs, axis=0)


if __name__ == "__main__":
    B = 16            # batch of SEAL subgraphs per pallas_call
    BG = 8            # graphs per grid step (8 * 16 nodes = 128-row super-block)
    N = 16            # nodes per (padded) subgraph
    H = 32            # hidden_units
    L = 2             # num_layers
    MAX_Z = 1000      # max_z (node-labeling vocab)

    key = jax.random.PRNGKey(0)
    k_graphs, k_zt, k_w, k_b, k_w1, k_b1, k_w2, k_b2 = jax.random.split(key, 8)

    # --- synthetic batch of graphs: symmetric random adjacency, no self loops ---
    def make_graph(k):
        k_adj, k_z = jax.random.split(k)
        upper = (jax.random.uniform(k_adj, (N, N)) < 0.3).astype(jnp.float32)
        upper = jnp.triu(upper, k=1)
        adj = upper + upper.T
        deg = jnp.maximum(jnp.sum(adj, axis=1), 1.0)              # DGL clamps degrees to >= 1
        d_inv_sqrt = deg ** -0.5
        a_hat = d_inv_sqrt[:, None] * adj * d_inv_sqrt[None, :]   # D^-1/2 A D^-1/2
        z = jax.random.randint(k_z, (N,), 0, MAX_Z)
        return a_hat, z

    a_hat_b, z_b = jax.vmap(make_graph)(jax.random.split(k_graphs, B))
    a_hat_b = a_hat_b.astype(jnp.bfloat16)                        # [B, N, N]
    z_b = z_b.astype(jnp.int32)[:, :, None]                       # [B, N, 1]

    # --- deterministic parameter init (shapes from __init__) ---
    z_table = (jax.random.normal(k_zt, (MAX_Z, H)) * 0.1).astype(jnp.bfloat16)   # z_embedding
    w_stack = (jax.random.normal(k_w, (L, H, H)) * 0.1).astype(jnp.bfloat16)     # GraphConv weights
    b_stack = (jax.random.normal(k_b, (L, 1, H)) * 0.01).astype(jnp.float32)     # GraphConv biases
    w1 = (jax.random.normal(k_w1, (H, H)) * 0.1).astype(jnp.float32)             # linear_1
    b1 = (jax.random.normal(k_b1, (1, H)) * 0.01).astype(jnp.float32)
    w2 = (jax.random.normal(k_w2, (H, 1)) * 0.1).astype(jnp.float32)             # linear_2
    b2 = (jax.random.normal(k_b2, (1, 1)) * 0.01).astype(jnp.float32)

    out = gcn_forward(z_b, a_hat_b, z_table, w_stack, b_stack, w1, b1, w2, b2, bg=BG)
    out = jax.block_until_ready(out)

    ref = reference_forward(z_b, a_hat_b, z_table, w_stack, b_stack, w1, b1, w2, b2)
    assert out.shape == (B, 1), out.shape
    assert jnp.allclose(out, ref, atol=1e-2, rtol=1e-2), (out, ref)

    print("KERNEL_OK")
</pallas_src>

<mosaic_0001>
module attributes {stable_mosaic.version = 11 : i64} {
  func.func @gcn_kernel(%arg0: i32, %arg1: memref<1x128x32xbf16, #tpu.memory_space<vmem>>, %arg2: memref<1x128x128xbf16, #tpu.memory_space<vmem>>, %arg3: memref<2x32x32xbf16, #tpu.memory_space<vmem>>, %arg4: memref<2x1x32xf32, #tpu.memory_space<vmem>>, %arg5: memref<8x128xf32, #tpu.memory_space<vmem>>, %arg6: memref<32x32xf32, #tpu.memory_space<vmem>>, %arg7: memref<1x32xf32, #tpu.memory_space<vmem>>, %arg8: memref<32x1xf32, #tpu.memory_space<vmem>>, %arg9: memref<1x1xf32, #tpu.memory_space<vmem>>, %arg10: memref<8x128xf32, #tpu.memory_space<vmem>>) attributes {dimension_semantics = [#tpu.dimension_semantics<parallel>], iteration_bounds = array<i64: 2>, scalar_prefetch = 0 : i64, scratch_operands = 0 : i64, tpu.core_type = #tpu.core_type<tc>, window_params = [{transform_indices = @transform_0, window_bounds = array<i64: 1, 128, 32>}, {transform_indices = @transform_1, window_bounds = array<i64: 1, 128, 128>}, {pipeline_mode = #tpu.pipeline_mode<synchronous>, transform_indices = @transform_2, window_bounds = array<i64: 2, 32, 32>}, {pipeline_mode = #tpu.pipeline_mode<synchronous>, transform_indices = @transform_3, window_bounds = array<i64: 2, 1, 32>}, {pipeline_mode = #tpu.pipeline_mode<synchronous>, transform_indices = @transform_4, window_bounds = array<i64: 8, 128>}, {pipeline_mode = #tpu.pipeline_mode<synchronous>, transform_indices = @transform_5, window_bounds = array<i64: 32, 32>}, {pipeline_mode = #tpu.pipeline_mode<synchronous>, transform_indices = @transform_6, window_bounds = array<i64: 1, 32>}, {pipeline_mode = #tpu.pipeline_mode<synchronous>, transform_indices = @transform_7, window_bounds = array<i64: 32, 1>}, {pipeline_mode = #tpu.pipeline_mode<synchronous>, transform_indices = @transform_8, window_bounds = array<i64: 1, 1>}, {transform_indices = @transform_9, window_bounds = array<i64: 8, 128>}]} {
    %c0 = arith.constant 0 : index
    %c0_0 = arith.constant 0 : index
    %c0_1 = arith.constant 0 : index
    %0 = vector.load %arg2[%c0, %c0_0, %c0_1] : memref<1x128x128xbf16, #tpu.memory_space<vmem>>, vector<1x128x128xbf16>
    %1 = vector.shape_cast %0 : vector<1x128x128xbf16> to vector<128x128xbf16>
    %c0_2 = arith.constant 0 : index
    %c0_3 = arith.constant 0 : index
    %c0_4 = arith.constant 0 : index
    %2 = vector.load %arg1[%c0_2, %c0_3, %c0_4] : memref<1x128x32xbf16, #tpu.memory_space<vmem>>, vector<1x128x32xbf16>
    %3 = vector.shape_cast %2 : vector<1x128x32xbf16> to vector<128x32xbf16>
    %cst = arith.constant dense<0.000000e+00> : vector<128x32xf32>
    %4 = tpu.matmul %1, %3, %cst {dimension_numbers = #tpu.dot_dimension_numbers<[1], [0], [0], [1], [0, 0, 1, 1], [], []>} : vector<128x128xbf16>, vector<128x32xbf16>, vector<128x32xf32> -> vector<128x32xf32>
    %5 = arith.truncf %4 : vector<128x32xf32> to vector<128x32xbf16>
    %c0_5 = arith.constant 0 : index
    %c0_6 = arith.constant 0 : index
    %c0_7 = arith.constant 0 : index
    %6 = vector.load %arg3[%c0_5, %c0_6, %c0_7] : memref<2x32x32xbf16, #tpu.memory_space<vmem>>, vector<1x32x32xbf16>
    %7 = vector.shape_cast %6 : vector<1x32x32xbf16> to vector<32x32xbf16>
    %cst_8 = arith.constant dense<0.000000e+00> : vector<128x32xf32>
    %8 = tpu.matmul %5, %7, %cst_8 {dimension_numbers = #tpu.dot_dimension_numbers<[1], [0], [0], [1], [0, 0, 1, 1], [], []>} : vector<128x32xbf16>, vector<32x32xbf16>, vector<128x32xf32> -> vector<128x32xf32>
    %c0_9 = arith.constant 0 : index
    %c0_10 = arith.constant 0 : index
    %c0_11 = arith.constant 0 : index
    %9 = vector.load %arg4[%c0_9, %c0_10, %c0_11] : memref<2x1x32xf32, #tpu.memory_space<vmem>>, vector<1x1x32xf32>
    %10 = vector.shape_cast %9 : vector<1x1x32xf32> to vector<1x32xf32>
    %11 = vector.broadcast %10 : vector<1x32xf32> to vector<128x32xf32>
    %12 = arith.addf %8, %11 : vector<128x32xf32>
    %cst_12 = arith.constant 0.000000e+00 : f32
    %13 = vector.broadcast %cst_12 : f32 to vector<128x32xf32>
    %14 = arith.maximumf %12, %13 : vector<128x32xf32>
    %15 = arith.truncf %14 : vector<128x32xf32> to vector<128x32xbf16>
    %cst_13 = arith.constant dense<0.000000e+00> : vector<128x32xf32>
    %16 = tpu.matmul %1, %15, %cst_13 {dimension_numbers = #tpu.dot_dimension_numbers<[1], [0], [0], [1], [0, 0, 1, 1], [], []>} : vector<128x128xbf16>, vector<128x32xbf16>, vector<128x32xf32> -> vector<128x32xf32>
    %17 = arith.truncf %16 : vector<128x32xf32> to vector<128x32xbf16>
    %c1 = arith.constant 1 : index
    %c0_14 = arith.constant 0 : index
    %c0_15 = arith.constant 0 : index
    %18 = vector.load %arg3[%c1, %c0_14, %c0_15] : memref<2x32x32xbf16, #tpu.memory_space<vmem>>, vector<1x32x32xbf16>
    %19 = vector.shape_cast %18 : vector<1x32x32xbf16> to vector<32x32xbf16>
    %cst_16 = arith.constant dense<0.000000e+00> : vector<128x32xf32>
    %20 = tpu.matmul %17, %19, %cst_16 {dimension_numbers = #tpu.dot_dimension_numbers<[1], [0], [0], [1], [0, 0, 1, 1], [], []>} : vector<128x32xbf16>, vector<32x32xbf16>, vector<128x32xf32> -> vector<128x32xf32>
    %c1_17 = arith.constant 1 : index
    %c0_18 = arith.constant 0 : index
    %c0_19 = arith.constant 0 : index
    %21 = vector.load %arg4[%c1_17, %c0_18, %c0_19] : memref<2x1x32xf32, #tpu.memory_space<vmem>>, vector<1x1x32xf32>
    %22 = vector.shape_cast %21 : vector<1x1x32xf32> to vector<1x32xf32>
    %23 = vector.broadcast %22 : vector<1x32xf32> to vector<128x32xf32>
    %24 = arith.addf %20, %23 : vector<128x32xf32>
    %c0_20 = arith.constant 0 : index
    %c0_21 = arith.constant 0 : index
    %25 = vector.load %arg5[%c0_20, %c0_21] : memref<8x128xf32, #tpu.memory_space<vmem>>, vector<8x128xf32>
    %cst_22 = arith.constant dense<0.000000e+00> : vector<8x32xf32>
    %26 = tpu.matmul %25, %24, %cst_22 {dimension_numbers = #tpu.dot_dimension_numbers<[1], [0], [0], [1], [0, 0, 1, 1], [], []>} : vector<8x128xf32>, vector<128x32xf32>, vector<8x32xf32> -> vector<8x32xf32>
    %c0_23 = arith.constant 0 : index
    %c0_24 = arith.constant 0 : index
    %27 = vector.load %arg6[%c0_23, %c0_24] : memref<32x32xf32, #tpu.memory_space<vmem>>, vector<32x32xf32>
    %cst_25 = arith.constant dense<0.000000e+00> : vector<8x32xf32>
    %28 = tpu.matmul %26, %27, %cst_25 {dimension_numbers = #tpu.dot_dimension_numbers<[1], [0], [0], [1], [0, 0, 1, 1], [], []>} : vector<8x32xf32>, vector<32x32xf32>, vector<8x32xf32> -> vector<8x32xf32>
    %c0_26 = arith.constant 0 : index
    %c0_27 = arith.constant 0 : index
    %29 = vector.load %arg7[%c0_26, %c0_27] : memref<1x32xf32, #tpu.memory_space<vmem>>, vector<1x32xf32>
    %30 = vector.broadcast %29 : vector<1x32xf32> to vector<8x32xf32>
    %31 = arith.addf %28, %30 : vector<8x32xf32>
    %cst_28 = arith.constant 0.000000e+00 : f32
    %32 = vector.broadcast %cst_28 : f32 to vector<8x32xf32>
    %33 = arith.maximumf %31, %32 : vector<8x32xf32>
    %c0_29 = arith.constant 0 : index
    %c0_30 = arith.constant 0 : index
    %34 = vector.load %arg8[%c0_29, %c0_30] : memref<32x1xf32, #tpu.memory_space<vmem>>, vector<32x1xf32>
    %cst_31 = arith.constant dense<0.000000e+00> : vector<8x1xf32>
    %35 = tpu.matmul %33, %34, %cst_31 {dimension_numbers = #tpu.dot_dimension_numbers<[1], [0], [0], [1], [0, 0, 1, 1], [], []>} : vector<8x32xf32>, vector<32x1xf32>, vector<8x1xf32> -> vector<8x1xf32>
    %c0_32 = arith.constant 0 : index
    %c0_33 = arith.constant 0 : index
    %36 = vector.load %arg9[%c0_32, %c0_33] : memref<1x1xf32, #tpu.memory_space<vmem>>, vector<1x1xf32>
    %37 = vector.broadcast %36 : vector<1x1xf32> to vector<8x1xf32>
    %38 = arith.addf %35, %37 : vector<8x1xf32>
    %39 = vector.shape_cast %38 : vector<8x1xf32> to vector<8x1xf32>
    %40 = vector.broadcast %39 : vector<8x1xf32> to vector<8x128xf32>
    %c0_34 = arith.constant 0 : index
    %c0_35 = arith.constant 0 : index
    %41 = vector.load %arg10[%c0_34, %c0_35] : memref<8x128xf32, #tpu.memory_space<vmem>>, vector<8x128xf32>
    tpu.vector_store %arg10[%c0_34, %c0_35], %40 {strides = array<i32>} : memref<8x128xf32, #tpu.memory_space<vmem>>, vector<8x128xf32>,
    return
  }
  func.func @transform_0(%arg0: i32) -> (i32, i32, i32) {
    %c0_i32 = arith.constant 0 : i32
    %c0_i32_0 = arith.constant 0 : i32
    %c0_i32_1 = arith.constant 0 : i32
    return %arg0, %c0_i32, %c0_i32_0 : i32, i32, i32
  }
  func.func @transform_1(%arg0: i32) -> (i32, i32, i32) {
    %c0_i32 = arith.constant 0 : i32
    %c0_i32_0 = arith.constant 0 : i32
    %c0_i32_1 = arith.constant 0 : i32
    return %arg0, %c0_i32, %c0_i32_0 : i32, i32, i32
  }
  func.func @transform_2(%arg0: i32) -> (i32, i32, i32) {
    %c0_i32 = arith.constant 0 : i32
    %c0_i32_0 = arith.constant 0 : i32
    %c0_i32_1 = arith.constant 0 : i32
    %c0_i32_2 = arith.constant 0 : i32
    return %c0_i32, %c0_i32_0, %c0_i32_1 : i32, i32, i32
  }
  func.func @transform_3(%arg0: i32) -> (i32, i32, i32) {
    %c0_i32 = arith.constant 0 : i32
    %c0_i32_0 = arith.constant 0 : i32
    %c0_i32_1 = arith.constant 0 : i32
    %c0_i32_2 = arith.constant 0 : i32
    return %c0_i32, %c0_i32_0, %c0_i32_1 : i32, i32, i32
  }
  func.func @transform_4(%arg0: i32) -> (i32, i32) {
    %c0_i32 = arith.constant 0 : i32
    %c0_i32_0 = arith.constant 0 : i32
    %c0_i32_1 = arith.constant 0 : i32
    return %c0_i32, %c0_i32_0 : i32, i32
  }
  func.func @transform_5(%arg0: i32) -> (i32, i32) {
    %c0_i32 = arith.constant 0 : i32
    %c0_i32_0 = arith.constant 0 : i32
    %c0_i32_1 = arith.constant 0 : i32
    return %c0_i32, %c0_i32_0 : i32, i32
  }
  func.func @transform_6(%arg0: i32) -> (i32, i32) {
    %c0_i32 = arith.constant 0 : i32
    %c0_i32_0 = arith.constant 0 : i32
    %c0_i32_1 = arith.constant 0 : i32
    return %c0_i32, %c0_i32_0 : i32, i32
  }
  func.func @transform_7(%arg0: i32) -> (i32, i32) {
    %c0_i32 = arith.constant 0 : i32
    %c0_i32_0 = arith.constant 0 : i32
    %c0_i32_1 = arith.constant 0 : i32
    return %c0_i32, %c0_i32_0 : i32, i32
  }
  func.func @transform_8(%arg0: i32) -> (i32, i32) {
    %c0_i32 = arith.constant 0 : i32
    %c0_i32_0 = arith.constant 0 : i32
    %c0_i32_1 = arith.constant 0 : i32
    return %c0_i32, %c0_i32_0 : i32, i32
  }
  func.func @transform_9(%arg0: i32) -> (i32, i32) {
    %c0_i32 = arith.constant 0 : i32
    %c0_i32_0 = arith.constant 0 : i32
    return %arg0, %c0_i32 : i32, i32
  }
}

</mosaic_0001>

<llo_original>
// kernel: tpu_custom_call.1
$region0: #{tpu_custom_call.1}
  #allocation0 [shape = 'u32[]', space=smem, size = 0x4, offset = 0x4, fixed_abs, tag = 'smem constant byte address 0x4 - core index']
  #allocation1 [shape = 'u32[144,128]{1,0:T(1,128)}', space=vmem, size = 0x12000, scoped, tag = 'internal scratch']
  #allocation2 [shape = 'f32[1,1]{1,0:T(1,128)S(1)}', space=vmem, size = 0x200, scoped, tag = 'scoped memory for tpu_custom_call.1']
  %s0 = inlined_call_operand.vmem [shape: bf16[2,128,32], index: 0, kind: input, shape index: {}]
  %s1 = inlined_call_operand.vmem [shape: bf16[2,128,128], index: 1, kind: input, shape index: {}]
  %s2 = inlined_call_operand.vmem [shape: bf16[2,32,32], index: 2, kind: input, shape index: {}]
  %s3 = inlined_call_operand.vmem [shape: f32[2,1,32], index: 3, kind: input, shape index: {}]
  %s4 = inlined_call_operand.vmem [shape: f32[8,128], index: 4, kind: input, shape index: {}]
  %s5 = inlined_call_operand.vmem [shape: f32[32,32], index: 5, kind: input, shape index: {}]
  %s6 = inlined_call_operand.vmem [shape: f32[1,32], index: 6, kind: input, shape index: {}]
  %s7 = inlined_call_operand.vmem [shape: f32[32,1], index: 7, kind: input, shape index: {}]
  %s8 = inlined_call_operand.<no memory space> [shape: f32[1,1], index: 8, kind: input, shape index: {}]
  %s9 = inlined_call_operand.hbm [shape: f32[16,128], index: 9, kind: output, shape index: {}]
  %s10 = sld [smem:[#allocation0]]
  $region69: #{tpu_custom_call.1} parent=0
    _
  %s12 = ssub.s32 1, %s10
  %s13 = scalar_select 0, %s12, %s10
  %v14 = vstv %s8
  %15 = vst [vmem:[#allocation2] sm:$0x1] %v14
  $region1: #{tpu_custom_call.1} parent=0
    #allocation3 [shape = 'u8[8192]{0}', space=vmem, size = 0x2000, scoped, tag = 'output window, operand 0']
    #allocation4 [shape = 's32[2]{0}', space=sflag, size = 0x8, scoped, tag = 'scoped memory for tpu_custom_call.1']
    %16 = vsyncpa [#allocation4], 0
    %s17 = scalar_lea.sflag [#allocation4], 1
    %18 = vsyncpa %s17, 0
    loop: start=0, step=1, limit=4
    $region2: #{tpu_custom_call.1} parent=1 // loop_pre_header
      _
    $region3: #{tpu_custom_call.1} parent=1 // loop_header
      %s20 = sphi 0, %s24
      %p21 = scmp.ge.s32.totalorder %s20, 4
      %s30 = sphi 0, %s32
      %s33 = sphi 0, %s30
      %s34 = sphi 0, %s33
      %s50 = sphi 0, %s34
      %s56 = sphi 0, %s58
      %s59 = sphi 0, %s56
      %s60 = sphi 0, %s59
      %s76 = sphi 0, %s60
      %s80 = sphi 0, %s80
      %s82 = sphi 0, %s80
      %s83 = sphi 0, %s82
      %s97 = sphi 0, %s83
      %s101 = sphi 0, %s101
      %s103 = sphi 0, %s101
      %s104 = sphi 0, %s103
      %s118 = sphi 0, %s104
      %s122 = sphi 0, %s122
      %s124 = sphi 0, %s122
      %s125 = sphi 0, %s124
      %s139 = sphi 0, %s125
      %s143 = sphi 0, %s143
      %s145 = sphi 0, %s143
      %s146 = sphi 0, %s145
      %s160 = sphi 0, %s146
      %s164 = sphi 0, %s164
      %s166 = sphi 0, %s164
      %s167 = sphi 0, %s166
      %s181 = sphi 0, %s167
      %s185 = sphi 0, %s185
      %s187 = sphi 0, %s185
      %s188 = sphi 0, %s187
      %s202 = sphi 0, %s188
      %s206 = sphi 0, %s206
      %s208 = sphi 0, %s206
      %s209 = sphi 0, %s208
      %s223 = sphi 0, %s209
      %s229 = sphi 0, %s231
      %s232 = sphi 0, %s229
      %s233 = sphi 0, %s232
      %s249 = sphi 0, %s233
    $region4: #{tpu_custom_call.1} parent=1 // loop_header_branch
      %23 = sbr.rel (%p21) target = $region8
    $region5: #{tpu_custom_call.1} parent=1 // loop_body
      %s25 = ssub.s32 %s20, 1
      %s26 = ssub.s32 %s20, 2
      %s27 = sadd.s32 %s20, 1
      %s28 = ssub.s32 %s20, %s27
      %p29 = scmp.eq.s32.totalorder %s28, 0
      %s31 = sadd.s32 %s30, 1
      %s32 = scalar_select %p29, %s30, %s31
      %p35 = pneg %p29
      %p36 = scmp.eq.s32.totalorder %s20, 1
      %p37 = por %p35, %p36
      %p38 = scmp.ne.s32.totalorder %s30, %s33
      %p39 = scmp.eq.s32.totalorder %s20, 0
      %p40 = por %p38, %p39
      %p41 = scmp.ne.s32.totalorder %s30, %s33
      %p42 = scmp.eq.s32.totalorder %s25, 1
      %p43 = por %p41, %p42
      %p44 = scmp.ne.s32.totalorder %s33, %s34
      %p45 = scmp.eq.s32.totalorder %s25, 0
      %p46 = por %p44, %p45
      %p47 = scmp.ne.s32.totalorder %s33, %s34
      %p48 = scmp.eq.s32.totalorder %s26, 1
      %p49 = por %p47, %p48
      %p51 = scmp.ne.s32.totalorder %s34, %s50
      %p52 = scmp.eq.s32.totalorder %s26, 0
      %p53 = por %p51, %p52
      %s54 = ssub.s32 %s20, %s27
      %p55 = scmp.eq.s32.totalorder %s54, 0
      %s57 = sadd.s32 %s56, 1
      %s58 = scalar_select %p55, %s56, %s57
      %p61 = pneg %p55
      %p62 = scmp.eq.s32.totalorder %s20, 1
      %p63 = por %p61, %p62
      %p64 = scmp.ne.s32.totalorder %s56, %s59
      %p65 = scmp.eq.s32.totalorder %s20, 0
      %p66 = por %p64, %p65
      %p67 = scmp.ne.s32.totalorder %s56, %s59
      %p68 = scmp.eq.s32.totalorder %s25, 1
      %p69 = por %p67, %p68
      %p70 = scmp.ne.s32.totalorder %s59, %s60
      %p71 = scmp.eq.s32.totalorder %s25, 0
      %p72 = por %p70, %p71
      %p73 = scmp.ne.s32.totalorder %s59, %s60
      %p74 = scmp.eq.s32.totalorder %s26, 1
      %p75 = por %p73, %p74
      %p77 = scmp.ne.s32.totalorder %s60, %s76
      %p78 = scmp.eq.s32.totalorder %s26, 0
      %p79 = por %p77, %p78
      %s81 = sadd.s32 %s80, 1
      %p84 = scmp.eq.s32.totalorder %s20, 1
      %p85 = scmp.ne.s32.totalorder %s80, %s82
      %p86 = scmp.eq.s32.totalorder %s20, 0
      %p87 = por %p85, %p86
      %p88 = scmp.ne.s32.totalorder %s80, %s82
      %p89 = scmp.eq.s32.totalorder %s25, 1
      %p90 = por %p88, %p89
      %p91 = scmp.ne.s32.totalorder %s82, %s83
      %p92 = scmp.eq.s32.totalorder %s25, 0
      %p93 = por %p91, %p92
      %p94 = scmp.ne.s32.totalorder %s82, %s83
      %p95 = scmp.eq.s32.totalorder %s26, 1
      %p96 = por %p94, %p95
      %p98 = scmp.ne.s32.totalorder %s83, %s97
      %p99 = scmp.eq.s32.totalorder %s26, 0
      %p100 = por %p98, %p99
      %s102 = sadd.s32 %s101, 1
      %p105 = scmp.eq.s32.totalorder %s20, 1
      %p106 = scmp.ne.s32.totalorder %s101, %s103
      %p107 = scmp.eq.s32.totalorder %s20, 0
      %p108 = por %p106, %p107
      %p109 = scmp.ne.s32.totalorder %s101, %s103
      %p110 = scmp.eq.s32.totalorder %s25, 1
      %p111 = por %p109, %p110
      %p112 = scmp.ne.s32.totalorder %s103, %s104
      %p113 = scmp.eq.s32.totalorder %s25, 0
      %p114 = por %p112, %p113
      %p115 = scmp.ne.s32.totalorder %s103, %s104
      %p116 = scmp.eq.s32.totalorder %s26, 1
      %p117 = por %p115, %p116
      %p119 = scmp.ne.s32.totalorder %s104, %s118
      %p120 = scmp.eq.s32.totalorder %s26, 0
      %p121 = por %p119, %p120
      %s123 = sadd.s32 %s122, 1
      %p126 = scmp.eq.s32.totalorder %s20, 1
      %p127 = scmp.ne.s32.totalorder %s122, %s124
      %p128 = scmp.eq.s32.totalorder %s20, 0
      %p129 = por %p127, %p128
      %p130 = scmp.ne.s32.totalorder %s122, %s124
      %p131 = scmp.eq.s32.totalorder %s25, 1
      %p132 = por %p130, %p131
      %p133 = scmp.ne.s32.totalorder %s124, %s125
      %p134 = scmp.eq.s32.totalorder %s25, 0
      %p135 = por %p133, %p134
      %p136 = scmp.ne.s32.totalorder %s124, %s125
      %p137 = scmp.eq.s32.totalorder %s26, 1
      %p138 = por %p136, %p137
      %p140 = scmp.ne.s32.totalorder %s125, %s139
      %p141 = scmp.eq.s32.totalorder %s26, 0
      %p142 = por %p140, %p141
      %s144 = sadd.s32 %s143, 1
      %p147 = scmp.eq.s32.totalorder %s20, 1
      %p148 = scmp.ne.s32.totalorder %s143, %s145
      %p149 = scmp.eq.s32.totalorder %s20, 0
      %p150 = por %p148, %p149
      %p151 = scmp.ne.s32.totalorder %s143, %s145
      %p152 = scmp.eq.s32.totalorder %s25, 1
      %p153 = por %p151, %p152
      %p154 = scmp.ne.s32.totalorder %s145, %s146
      %p155 = scmp.eq.s32.totalorder %s25, 0
      %p156 = por %p154, %p155
      %p157 = scmp.ne.s32.totalorder %s145, %s146
      %p158 = scmp.eq.s32.totalorder %s26, 1
      %p159 = por %p157, %p158
      %p161 = scmp.ne.s32.totalorder %s146, %s160
      %p162 = scmp.eq.s32.totalorder %s26, 0
      %p163 = por %p161, %p162
      %s165 = sadd.s32 %s164, 1
      %p168 = scmp.eq.s32.totalorder %s20, 1
      %p169 = scmp.ne.s32.totalorder %s164, %s166
      %p170 = scmp.eq.s32.totalorder %s20, 0
      %p171 = por %p169, %p170
      %p172 = scmp.ne.s32.totalorder %s164, %s166
      %p173 = scmp.eq.s32.totalorder %s25, 1
      %p174 = por %p172, %p173
      %p175 = scmp.ne.s32.totalorder %s166, %s167
      %p176 = scmp.eq.s32.totalorder %s25, 0
      %p177 = por %p175, %p176
      %p178 = scmp.ne.s32.totalorder %s166, %s167
      %p179 = scmp.eq.s32.totalorder %s26, 1
      %p180 = por %p178, %p179
      %p182 = scmp.ne.s32.totalorder %s167, %s181
      %p183 = scmp.eq.s32.totalorder %s26, 0
      %p184 = por %p182, %p183
      %s186 = sadd.s32 %s185, 1
      %p189 = scmp.eq.s32.totalorder %s20, 1
      %p190 = scmp.ne.s32.totalorder %s185, %s187
      %p191 = scmp.eq.s32.totalorder %s20, 0
      %p192 = por %p190, %p191
      %p193 = scmp.ne.s32.totalorder %s185, %s187
      %p194 = scmp.eq.s32.totalorder %s25, 1
      %p195 = por %p193, %p194
      %p196 = scmp.ne.s32.totalorder %s187, %s188
      %p197 = scmp.eq.s32.totalorder %s25, 0
      %p198 = por %p196, %p197
      %p199 = scmp.ne.s32.totalorder %s187, %s188
      %p200 = scmp.eq.s32.totalorder %s26, 1
      %p201 = por %p199, %p200
      %p203 = scmp.ne.s32.totalorder %s188, %s202
      %p204 = scmp.eq.s32.totalorder %s26, 0
      %p205 = por %p203, %p204
      %s207 = sadd.s32 %s206, 1
      %p210 = scmp.eq.s32.totalorder %s20, 1
      %p211 = scmp.ne.s32.totalorder %s206, %s208
      %p212 = scmp.eq.s32.totalorder %s20, 0
      %p213 = por %p211, %p212
      %p214 = scmp.ne.s32.totalorder %s206, %s208
      %p215 = scmp.eq.s32.totalorder %s25, 1
      %p216 = por %p214, %p215
      %p217 = scmp.ne.s32.totalorder %s208, %s209
      %p218 = scmp.eq.s32.totalorder %s25, 0
      %p219 = por %p217, %p218
      %p220 = scmp.ne.s32.totalorder %s208, %s209
      %p221 = scmp.eq.s32.totalorder %s26, 1
      %p222 = por %p220, %p221
      %p224 = scmp.ne.s32.totalorder %s209, %s223
      %p225 = scmp.eq.s32.totalorder %s26, 0
      %p226 = por %p224, %p225
      %s227 = ssub.s32 %s20, %s27
      %p228 = scmp.eq.s32.totalorder %s227, 0
      %s230 = sadd.s32 %s229, 1
      %s231 = scalar_select %p228, %s229, %s230
      %p234 = pneg %p228
      %p235 = scmp.eq.s32.totalorder %s20, 1
      %p236 = por %p234, %p235
      %p237 = scmp.ne.s32.totalorder %s229, %s232
      %p238 = scmp.eq.s32.totalorder %s20, 0
      %p239 = por %p237, %p238
      %p240 = scmp.ne.s32.totalorder %s229, %s232
      %p241 = scmp.eq.s32.totalorder %s25, 1
      %p242 = por %p240, %p241
      %p243 = scmp.ne.s32.totalorder %s232, %s233
      %p244 = scmp.eq.s32.totalorder %s25, 0
      %p245 = por %p243, %p244
      %p246 = scmp.ne.s32.totalorder %s232, %s233
      %p247 = scmp.eq.s32.totalorder %s26, 1
      %p248 = por %p246, %p247
      %p250 = scmp.ne.s32.totalorder %s233, %s249
      %p251 = scmp.eq.s32.totalorder %s26, 0
      %p252 = por %p250, %p251
      %p253 = scmp.le.s32.totalorder 1, %s20
      %p254 = scmp.lt.s32.totalorder %s20, 3
      %p255 = pnand %p253, %p254
      %p256 = pneg %p255
      // Predicated region
      $region9: #{tpu_custom_call.1} parent=5 // pred_check
        _
      $region10: #{tpu_custom_call.1} parent=5 // pred_check_branch
        %258 = sbr.rel (%p255) target = $region12
      $region11: #{tpu_custom_call.1} parent=5 // pred_region
        %s259 = ssub.s32 %s20, 1
        // Predicated region
        $region13: #{tpu_custom_call.1} parent=11 // pred_check
          %p260 = pneg %p93
        $region14: #{tpu_custom_call.1} parent=11 // pred_check_branch
          %262 = sbr.rel (%p260) target = $region16
        $region15: #{tpu_custom_call.1} parent=11 // pred_region
          _
        $region16: #{tpu_custom_call.1} parent=11 // pred_fallthru
          _
        // Predicated region
        $region17: #{tpu_custom_call.1} parent=11 // pred_check
          %p263 = pneg %p114
        $region18: #{tpu_custom_call.1} parent=11 // pred_check_branch
          %265 = sbr.rel (%p263) target = $region20
        $region19: #{tpu_custom_call.1} parent=11 // pred_region
          _
        $region20: #{tpu_custom_call.1} parent=11 // pred_fallthru
          _
        // Predicated region
        $region21: #{tpu_custom_call.1} parent=11 // pred_check
          %p266 = pneg %p135
        $region22: #{tpu_custom_call.1} parent=11 // pred_check_branch
          %268 = sbr.rel (%p266) target = $region24
        $region23: #{tpu_custom_call.1} parent=11 // pred_region
          _
        $region24: #{tpu_custom_call.1} parent=11 // pred_fallthru
          _
        // Predicated region
        $region25: #{tpu_custom_call.1} parent=11 // pred_check
          %p269 = pneg %p156
        $region26: #{tpu_custom_call.1} parent=11 // pred_check_branch
          %271 = sbr.rel (%p269) target = $region28
        $region27: #{tpu_custom_call.1} parent=11 // pred_region
          _
        $region28: #{tpu_custom_call.1} parent=11 // pred_fallthru
          _
        // Predicated region
        $region29: #{tpu_custom_call.1} parent=11 // pred_check
          %p272 = pneg %p177
        $region30: #{tpu_custom_call.1} parent=11 // pred_check_branch
          %274 = sbr.rel (%p272) target = $region32
        $region31: #{tpu_custom_call.1} parent=11 // pred_region
          _
        $region32: #{tpu_custom_call.1} parent=11 // pred_fallthru
          _
        // Predicated region
        $region33: #{tpu_custom_call.1} parent=11 // pred_check
          %p275 = pneg %p198
        $region34: #{tpu_custom_call.1} parent=11 // pred_check_branch
          %277 = sbr.rel (%p275) target = $region36
        $region35: #{tpu_custom_call.1} parent=11 // pred_region
          _
        $region36: #{tpu_custom_call.1} parent=11 // pred_fallthru
          _
        // Predicated region
        $region37: #{tpu_custom_call.1} parent=11 // pred_check
          %p278 = pneg %p219
        $region38: #{tpu_custom_call.1} parent=11 // pred_check_branch
          %280 = sbr.rel (%p278) target = $region40
        $region39: #{tpu_custom_call.1} parent=11 // pred_region
          _
        $region40: #{tpu_custom_call.1} parent=11 // pred_fallthru
          _
      $region12: #{tpu_custom_call.1} parent=5 // pred_fallthru
        _
      %p281 = scmp.lt.s32.totalorder %s20, 2
      // Predicated region
      $region41: #{tpu_custom_call.1} parent=5 // pred_check
        %p282 = pneg %p281
      $region42: #{tpu_custom_call.1} parent=5 // pred_check_branch
        %284 = sbr.rel (%p282) target = $region44
      $region43: #{tpu_custom_call.1} parent=5 // pred_region
        // Predicated region
        $region45: #{tpu_custom_call.1} parent=43 // pred_check
          %p285 = pneg %p40
        $region46: #{tpu_custom_call.1} parent=43 // pred_check_branch
          %287 = sbr.rel (%p285) target = $region48
        $region47: #{tpu_custom_call.1} parent=43 // pred_region
          %p288 = scmp.lt.s32.totalorder %s20, 1
          %s289 = scalar_select %p288, %s20, 1
          %s290 = smul.addr %s289, 16
          %s291 = smul.addr %s290, 4
          %s292 = scalar_lea.vmem %s0, %s291
        $region48: #{tpu_custom_call.1} parent=43 // pred_fallthru
          _
        // Predicated region
        $region49: #{tpu_custom_call.1} parent=43 // pred_check
          %p293 = pneg %p66
        $region50: #{tpu_custom_call.1} parent=43 // pred_check_branch
          %295 = sbr.rel (%p293) target = $region52
        $region51: #{tpu_custom_call.1} parent=43 // pred_region
          %p296 = scmp.lt.s32.totalorder %s20, 1
          %s297 = scalar_select %p296, %s20, 1
          %s298 = smul.addr %s297, 16
          %s299 = smul.addr %s298, 4
          %s300 = scalar_lea.vmem %s1, %s299
        $region52: #{tpu_custom_call.1} parent=43 // pred_fallthru
          _
      $region44: #{tpu_custom_call.1} parent=5 // pred_fallthru
        _
      %p301 = scmp.le.s32.totalorder 1, %s20
      %p302 = scmp.lt.s32.totalorder %s20, 3
      %p303 = pnand %p301, %p302
      %p304 = pneg %p303
      // Predicated region
      $region53: #{tpu_custom_call.1} parent=5 // pred_check
        _
      $region54: #{tpu_custom_call.1} parent=5 // pred_check_branch
        %306 = sbr.rel (%p303) target = $region56
      $region55: #{tpu_custom_call.1} parent=5 // pred_region
        %s307 = ssub.s32 %s20, 1
        %p308 = scmp.lt.s32.totalorder %s25, 1
        %s309 = scalar_select %p308, %s25, 1
        %s310 = smul.addr %s309, 16
        %s311 = smul.addr %s310, 4
        %s312 = scalar_lea.vmem %s0, %s311
        %p313 = pneg %p46
        %p314 = pneg %p43
        %p315 = scmp.lt.s32.totalorder %s25, 1
        %s316 = scalar_select %p315, %s25, 1
        %s317 = smul.addr %s316, 16
        %s318 = smul.addr %s317, 4
        %s319 = scalar_lea.vmem %s1, %s318
        %p320 = pneg %p72
        %p321 = pneg %p69
        %p322 = pneg %p93
        %p323 = pneg %p90
        %p324 = pneg %p114
        %p325 = pneg %p111
        %p326 = pneg %p135
        %p327 = pneg %p132
        %p328 = pneg %p156
        %p329 = pneg %p153
        %p330 = pneg %p177
        %p331 = pneg %p174
        %p332 = pneg %p198
        %p333 = pneg %p195
        %p334 = pneg %p219
        %p335 = pneg %p216
        %p336 = pneg %p245
        %p337 = pneg %p242
        %s338 = sand.u32 %s232, 1
        %s339 = scalar_lea.sflag [#allocation4], %s338
        %s340 = sand.u32 %s232, 1
        %s341 = smul.addr %s340, 8
        %s342 = scalar_lea.vmem [#allocation3], %s341
        %p343 = scmp.lt.s32.totalorder %s25, 1
        %s344 = scalar_select %p343, %s25, 1
        %s345 = smul.addr %s344, 16
        %s346 = smul.addr %s345, 4
        %s347 = scalar_lea.vmem %s0, %s346
        %p348 = scmp.lt.s32.totalorder %s25, 1
        %s349 = scalar_select %p348, %s25, 1
        %s350 = smul.addr %s349, 16
        %s351 = smul.addr %s350, 4
        %s352 = scalar_lea.vmem %s1, %s351
        %v354 = vld [vmem:[%s352] sm:$0xf]
        %v355 = vld [vmem:[%s352 + $0x4] sm:$0xf]
        %v356 = vld [vmem:[%s352 + $0x8] sm:$0xf]
        %v357 = vld [vmem:[%s352 + $0xc] sm:$0xf]
        %v358 = vld [vmem:[%s352 + $0x10] sm:$0xf]
        %v359 = vld [vmem:[%s352 + $0x14] sm:$0xf]
        %v360 = vld [vmem:[%s352 + $0x18] sm:$0xf]
        %v361 = vld [vmem:[%s352 + $0x1c] sm:$0xf]
        %v362 = vld [vmem:[%s352 + $0x20] sm:$0xf]
        %v363 = vld [vmem:[%s352 + $0x24] sm:$0xf]
        %v364 = vld [vmem:[%s352 + $0x28] sm:$0xf]
        %v365 = vld [vmem:[%s352 + $0x2c] sm:$0xf]
        %v366 = vld [vmem:[%s352 + $0x30] sm:$0xf]
        %v367 = vld [vmem:[%s352 + $0x34] sm:$0xf]
        %v368 = vld [vmem:[%s352 + $0x38] sm:$0xf]
        %v369 = vld [vmem:[%s352 + $0x3c] sm:$0xf]
        %v370 = vld [vmem:[%s347] sm:$0xf]
        %v371 = vld [vmem:[%s347 + $0x4] sm:$0xf]
        %v372 = vld [vmem:[%s347 + $0x8] sm:$0xf]
        %v373 = vld [vmem:[%s347 + $0xc] sm:$0xf]
        %v374 = vld [vmem:[%s347 + $0x10] sm:$0xf]
        %v375 = vld [vmem:[%s347 + $0x14] sm:$0xf]
        %v376 = vld [vmem:[%s347 + $0x18] sm:$0xf]
        %v377 = vld [vmem:[%s347 + $0x1c] sm:$0xf]
        %v378 = vld [vmem:[%s347 + $0x20] sm:$0xf]
        %v379 = vld [vmem:[%s347 + $0x24] sm:$0xf]
        %v380 = vld [vmem:[%s347 + $0x28] sm:$0xf]
        %v381 = vld [vmem:[%s347 + $0x2c] sm:$0xf]
        %v382 = vld [vmem:[%s347 + $0x30] sm:$0xf]
        %v383 = vld [vmem:[%s347 + $0x34] sm:$0xf]
        %v384 = vld [vmem:[%s347 + $0x38] sm:$0xf]
        %v385 = vld [vmem:[%s347 + $0x3c] sm:$0xf]
        %v402 = vunpack.c.l.b16 %v354
        %v403 = vunpack.c.l.b16 %v355
        %v404 = vunpack.c.l.b16 %v356
        %v405 = vunpack.c.l.b16 %v357
        %v406 = vunpack.c.l.b16 %v358
        %v407 = vunpack.c.l.b16 %v359
        %v408 = vunpack.c.l.b16 %v360
        %v409 = vunpack.c.l.b16 %v361
        %v410 = vunpack.c.l.b16 %v362
        %v411 = vunpack.c.l.b16 %v363
        %v412 = vunpack.c.l.b16 %v364
        %v413 = vunpack.c.l.b16 %v365
        %v414 = vunpack.c.l.b16 %v366
        %v415 = vunpack.c.l.b16 %v367
        %v416 = vunpack.c.l.b16 %v368
        %v417 = vunpack.c.l.b16 %v369
        %v418 = vpack.c.b16 %v403, %v402
        %v419 = vpack.c.b16 %v405, %v404
        %v420 = vpack.c.b16 %v407, %v406
        %v421 = vpack.c.b16 %v409, %v408
        %v422 = vpack.c.b16 %v411, %v410
        %v423 = vpack.c.b16 %v413, %v412
        %v424 = vpack.c.b16 %v415, %v414
        %v425 = vpack.c.b16 %v417, %v416
        %v450 = vunpack.c.l.b16 %v370
        %v451 = vunpack.c.l.b16 %v371
        %v452 = vunpack.c.l.b16 %v372
        %v453 = vunpack.c.l.b16 %v373
        %v454 = vunpack.c.l.b16 %v374
        %v455 = vunpack.c.l.b16 %v375
        %v456 = vunpack.c.l.b16 %v376
        %v457 = vunpack.c.l.b16 %v377
        %v458 = vunpack.c.l.b16 %v378
        %v459 = vunpack.c.l.b16 %v379
        %v460 = vunpack.c.l.b16 %v380
        %v461 = vunpack.c.l.b16 %v381
        %v462 = vunpack.c.l.b16 %v382
        %v463 = vunpack.c.l.b16 %v383
        %v464 = vunpack.c.l.b16 %v384
        %v465 = vunpack.c.l.b16 %v385
        %v466 = vpack.c.b16 %v451, %v450
        %v467 = vpack.c.b16 %v453, %v452
        %v468 = vpack.c.b16 %v455, %v454
        %v469 = vpack.c.b16 %v457, %v456
        %v470 = vpack.c.b16 %v459, %v458
        %v471 = vpack.c.b16 %v461, %v460
        %v472 = vpack.c.b16 %v463, %v462
        %v473 = vpack.c.b16 %v465, %v464
        %482 = vmatprep.subr.bf16.mxu0 0
        %483 = vmatpush1.bf16.msra.mxu0 %v466
        %484 = vmatprep.subr.bf16.mxu0 0
        %485 = vmatpush1.bf16.msra.mxu0 %v467
        %486 = vmatprep.subr.bf16.mxu0 0
        %487 = vmatpush1.bf16.msra.mxu0 %v468
        %488 = vmatprep.subr.bf16.mxu0 0
        %489 = vmatpush1.bf16.msra.mxu0 %v469
        %490 = vmatprep.subr.bf16.mxu0 0
        %491 = vmatpush1.bf16.msra.mxu0 %v470
        %492 = vmatprep.subr.bf16.mxu0 0
        %493 = vmatpush1.bf16.msra.mxu0 %v471
        %494 = vmatprep.subr.bf16.mxu0 0
        %495 = vmatpush1.bf16.msra.mxu0 %v472
        %496 = vmatprep.subr.bf16.mxu0 0
        %497 = vmatpush1.bf16.msra.mxu0 %v473
        %498 = vmatprep.subr.bf16.mxu0 0
        %499 = vmatpush1.bf16.msra.mxu0 0
        %500 = vmatprep.subr.bf16.mxu0 0
        %501 = vmatpush1.bf16.msra.mxu0 0
        %502 = vmatprep.subr.bf16.mxu0 0
        %503 = vmatpush1.bf16.msra.mxu0 0
        %504 = vmatprep.subr.bf16.mxu0 0
        %505 = vmatpush1.bf16.msra.mxu0 0
        %506 = vmatprep.subr.bf16.mxu0 0
        %507 = vmatpush1.bf16.msra.mxu0 0
        %508 = vmatprep.subr.bf16.mxu0 0
        %509 = vmatpush1.bf16.msra.mxu0 0
        %510 = vmatprep.subr.bf16.mxu0 0
        %511 = vmatpush1.bf16.msra.mxu0 0
        %512 = vmatprep.subr.bf16.mxu0 0
        %513 = vmatpush1.bf16.msra.mxu0 0
        %514 = vmatprep.mubr.bf16.mxu0 0
        %515 = vmatmul.mubr.bf16.gmra.mrb[0].mxu0 %v418
        %v516 = vpop.f32.mrb[0].mxu0
        %v517 = vadd.f32 0.0, %v516
        %v518 = vpop.f32.mrb[0].mxu0
        %v519 = vpop.f32.mrb[0].mxu0
        %v520 = vadd.f32 0.0, %v519
        %v521 = vpop.f32.mrb[0].mxu0
        %522 = vmatprep.mubr.bf16.mxu0 0
        %523 = vmatmul.mubr.bf16.gmra.mrb[0].mxu0 %v419
        %v524 = vpop.f32.mrb[0].mxu0
        %v525 = vadd.f32 0.0, %v524
        %v526 = vpop.f32.mrb[0].mxu0
        %v527 = vpop.f32.mrb[0].mxu0
        %v528 = vadd.f32 0.0, %v527
        %v529 = vpop.f32.mrb[0].mxu0
        %530 = vmatprep.mubr.bf16.mxu0 0
        %531 = vmatmul.mubr.bf16.gmra.mrb[0].mxu0 %v420
        %v532 = vpop.f32.mrb[0].mxu0
        %v533 = vadd.f32 0.0, %v532
        %v534 = vpop.f32.mrb[0].mxu0
        %v535 = vpop.f32.mrb[0].mxu0
        %v536 = vadd.f32 0.0, %v535
        %v537 = vpop.f32.mrb[0].mxu0
        %538 = vmatprep.mubr.bf16.mxu0 0
        %539 = vmatmul.mubr.bf16.gmra.mrb[0].mxu0 %v421
        %v540 = vpop.f32.mrb[0].mxu0
        %v541 = vadd.f32 0.0, %v540
        %v542 = vpop.f32.mrb[0].mxu0
        %v543 = vpop.f32.mrb[0].mxu0
        %v544 = vadd.f32 0.0, %v543
        %v545 = vpop.f32.mrb[0].mxu0
        %546 = vmatprep.mubr.bf16.mxu0 0
        %547 = vmatmul.mubr.bf16.gmra.mrb[0].mxu0 %v422
        %v548 = vpop.f32.mrb[0].mxu0
        %v549 = vadd.f32 0.0, %v548
        %v550 = vpop.f32.mrb[0].mxu0
        %v551 = vpop.f32.mrb[0].mxu0
        %v552 = vadd.f32 0.0, %v551
        %v553 = vpop.f32.mrb[0].mxu0
        %554 = vmatprep.mubr.bf16.mxu0 0
        %555 = vmatmul.mubr.bf16.gmra.mrb[0].mxu0 %v423
        %v556 = vpop.f32.mrb[0].mxu0
        %v557 = vadd.f32 0.0, %v556
        %v558 = vpop.f32.mrb[0].mxu0
        %v559 = vpop.f32.mrb[0].mxu0
        %v560 = vadd.f32 0.0, %v559
        %v561 = vpop.f32.mrb[0].mxu0
        %562 = vmatprep.mubr.bf16.mxu0 0
        %563 = vmatmul.mubr.bf16.gmra.mrb[0].mxu0 %v424
        %v564 = vpop.f32.mrb[0].mxu0
        %v565 = vadd.f32 0.0, %v564
        %v566 = vpop.f32.mrb[0].mxu0
        %v567 = vpop.f32.mrb[0].mxu0
        %v568 = vadd.f32 0.0, %v567
        %v569 = vpop.f32.mrb[0].mxu0
        %570 = vmatprep.mubr.bf16.mxu0 0
        %571 = vmatmul.mubr.bf16.gmra.mrb[0].mxu0 %v425
        %v572 = vpop.f32.mrb[0].mxu0
        %v573 = vadd.f32 0.0, %v572
        %v574 = vpop.f32.mrb[0].mxu0
        %v575 = vpop.f32.mrb[0].mxu0
        %v576 = vadd.f32 0.0, %v575
        %v577 = vpop.f32.mrb[0].mxu0
        %578 = vdwg.mxu0
        %v579 = vpack.c.bf16 %v520, %v517
        %v580 = vpack.c.bf16 %v528, %v525
        %v581 = vpack.c.bf16 %v536, %v533
        %v582 = vpack.c.bf16 %v544, %v541
        %v583 = vpack.c.bf16 %v552, %v549
        %v584 = vpack.c.bf16 %v560, %v557
        %v585 = vpack.c.bf16 %v568, %v565
        %v586 = vpack.c.bf16 %v576, %v573
        %v587 = vld [vmem:[%s2] sm:$0xf]
        %v588 = vld [vmem:[%s2 + $0x4] sm:$0xf]
        %v589 = vld [vmem:[%s2 + $0x8] sm:$0xf]
        %v590 = vld [vmem:[%s2 + $0xc] sm:$0xf]
        %v591 = vld [vmem:[%s3] sm:$0x1]
        %v593 = vlaneseq
        %v594 = vshrl.u32 %v593, 7
        %v595 = vsub.s32 0, %v594
        %v596 = vrot.slane %v591, %v595
        %v602 = vunpack.c.l.b16 %v587
        %v603 = vunpack.c.l.b16 %v588
        %v604 = vunpack.c.l.b16 %v589
        %v605 = vunpack.c.l.b16 %v590
        %v606 = vpack.c.b16 %v603, %v602
        %v607 = vpack.c.b16 %v605, %v604
        %vm610 = vcmask 261120
        %v612 = vsel %vm610, %v579, 0
        %v615 = vsel %vm610, %v580, 0
        %v618 = vsel %vm610, %v581, 0
        %v621 = vsel %vm610, %v582, 0
        %v624 = vsel %vm610, %v583, 0
        %v627 = vsel %vm610, %v584, 0
        %v630 = vsel %vm610, %v585, 0
        %v633 = vsel %vm610, %v586, 0
        %635 = vmatprep.subr.bf16.mxu0 0
        %636 = vmatpush1.bf16.msra.mxu0 %v606
        %637 = vmatprep.subr.bf16.mxu0 0
        %638 = vmatpush1.bf16.msra.mxu0 %v607
        %639 = vmatprep.subr.bf16.mxu0 0
        %640 = vmatpush1.bf16.msra.mxu0 0
        %641 = vmatprep.subr.bf16.mxu0 0
        %642 = vmatpush1.bf16.msra.mxu0 0
        %643 = vmatprep.subr.bf16.mxu0 0
        %644 = vmatpush1.bf16.msra.mxu0 0
        %645 = vmatprep.subr.bf16.mxu0 0
        %646 = vmatpush1.bf16.msra.mxu0 0
        %647 = vmatprep.subr.bf16.mxu0 0
        %648 = vmatpush1.bf16.msra.mxu0 0
        %649 = vmatprep.subr.bf16.mxu0 0
        %650 = vmatpush1.bf16.msra.mxu0 0
        %651 = vmatprep.subr.bf16.mxu0 0
        %652 = vmatpush1.bf16.msra.mxu0 0
        %653 = vmatprep.subr.bf16.mxu0 0
        %654 = vmatpush1.bf16.msra.mxu0 0
        %655 = vmatprep.subr.bf16.mxu0 0
        %656 = vmatpush1.bf16.msra.mxu0 0
        %657 = vmatprep.subr.bf16.mxu0 0
        %658 = vmatpush1.bf16.msra.mxu0 0
        %659 = vmatprep.subr.bf16.mxu0 0
        %660 = vmatpush1.bf16.msra.mxu0 0
        %661 = vmatprep.subr.bf16.mxu0 0
        %662 = vmatpush1.bf16.msra.mxu0 0
        %663 = vmatprep.subr.bf16.mxu0 0
        %664 = vmatpush1.bf16.msra.mxu0 0
        %665 = vmatprep.subr.bf16.mxu0 0
        %666 = vmatpush1.bf16.msra.mxu0 0
        %667 = vmatprep.mubr.bf16.mxu0 0
        %668 = vmatmul.mubr.bf16.gmra.mrb[0].mxu0 %v612
        %v669 = vpop.f32.mrb[0].mxu0
        %v670 = vadd.f32 %v596, %v669
        %v671 = vpop.f32.mrb[0].mxu0
        %v672 = vpop.f32.mrb[0].mxu0
        %v673 = vadd.f32 %v596, %v672
        %v674 = vpop.f32.mrb[0].mxu0
        %675 = vmatprep.mubr.bf16.mxu0 0
        %676 = vmatmul.mubr.bf16.gmra.mrb[0].mxu0 %v615
        %v677 = vpop.f32.mrb[0].mxu0
        %v678 = vadd.f32 %v596, %v677
        %v679 = vpop.f32.mrb[0].mxu0
        %v680 = vpop.f32.mrb[0].mxu0
        %v681 = vadd.f32 %v596, %v680
        %v682 = vpop.f32.mrb[0].mxu0
        %683 = vmatprep.mubr.bf16.mxu0 0
        %684 = vmatmul.mubr.bf16.gmra.mrb[0].mxu0 %v618
        %v685 = vpop.f32.mrb[0].mxu0
        %v686 = vadd.f32 %v596, %v685
        %v687 = vpop.f32.mrb[0].mxu0
        %v688 = vpop.f32.mrb[0].mxu0
        %v689 = vadd.f32 %v596, %v688
        %v690 = vpop.f32.mrb[0].mxu0
        %691 = vmatprep.mubr.bf16.mxu0 0
        %692 = vmatmul.mubr.bf16.gmra.mrb[0].mxu0 %v621
        %v693 = vpop.f32.mrb[0].mxu0
        %v694 = vadd.f32 %v596, %v693
        %v695 = vpop.f32.mrb[0].mxu0
        %v696 = vpop.f32.mrb[0].mxu0
        %v697 = vadd.f32 %v596, %v696
        %v698 = vpop.f32.mrb[0].mxu0
        %699 = vmatprep.mubr.bf16.mxu0 0
        %700 = vmatmul.mubr.bf16.gmra.mrb[0].mxu0 %v624
        %v701 = vpop.f32.mrb[0].mxu0
        %v702 = vadd.f32 %v596, %v701
        %v703 = vpop.f32.mrb[0].mxu0
        %v704 = vpop.f32.mrb[0].mxu0
        %v705 = vadd.f32 %v596, %v704
        %v706 = vpop.f32.mrb[0].mxu0
        %707 = vmatprep.mubr.bf16.mxu0 0
        %708 = vmatmul.mubr.bf16.gmra.mrb[0].mxu0 %v627
        %v709 = vpop.f32.mrb[0].mxu0
        %v710 = vadd.f32 %v596, %v709
        %v711 = vpop.f32.mrb[0].mxu0
        %v712 = vpop.f32.mrb[0].mxu0
        %v713 = vadd.f32 %v596, %v712
        %v714 = vpop.f32.mrb[0].mxu0
        %715 = vmatprep.mubr.bf16.mxu0 0
        %716 = vmatmul.mubr.bf16.gmra.mrb[0].mxu0 %v630
        %v717 = vpop.f32.mrb[0].mxu0
        %v718 = vadd.f32 %v596, %v717
        %v719 = vpop.f32.mrb[0].mxu0
        %v720 = vpop.f32.mrb[0].mxu0
        %v721 = vadd.f32 %v596, %v720
        %v722 = vpop.f32.mrb[0].mxu0
        %723 = vmatprep.mubr.bf16.mxu0 0
        %724 = vmatmul.mubr.bf16.gmra.mrb[0].mxu0 %v633
        %v725 = vpop.f32.mrb[0].mxu0
        %v726 = vadd.f32 %v596, %v725
        %v727 = vpop.f32.mrb[0].mxu0
        %v728 = vpop.f32.mrb[0].mxu0
        %v729 = vadd.f32 %v596, %v728
        %v730 = vpop.f32.mrb[0].mxu0
        %731 = vdwg.mxu0
        %v732 = vmax.f32 %v670, 0.0
        %v733 = vmax.f32 %v673, 0.0
        %v734 = vmax.f32 %v678, 0.0
        %v735 = vmax.f32 %v681, 0.0
        %v736 = vmax.f32 %v686, 0.0
        %v737 = vmax.f32 %v689, 0.0
        %v738 = vmax.f32 %v694, 0.0
        %v739 = vmax.f32 %v697, 0.0
        %v740 = vmax.f32 %v702, 0.0
        %v741 = vmax.f32 %v705, 0.0
        %v742 = vmax.f32 %v710, 0.0
        %v743 = vmax.f32 %v713, 0.0
        %v744 = vmax.f32 %v718, 0.0
        %v745 = vmax.f32 %v721, 0.0
        %v746 = vmax.f32 %v726, 0.0
        %v747 = vmax.f32 %v729, 0.0
        %v748 = vpack.c.bf16 %v733, %v732
        %v749 = vpack.c.bf16 %v735, %v734
        %v750 = vpack.c.bf16 %v737, %v736
        %v751 = vpack.c.bf16 %v739, %v738
        %v752 = vpack.c.bf16 %v741, %v740
        %v753 = vpack.c.bf16 %v743, %v742
        %v754 = vpack.c.bf16 %v745, %v744
        %v755 = vpack.c.bf16 %v747, %v746
        %756 = vmatprep.subr.bf16.mxu0 0
        %757 = vmatpush1.bf16.msra.mxu0 %v748
        %758 = vmatprep.subr.bf16.mxu0 0
        %759 = vmatpush1.bf16.msra.mxu0 %v749
        %760 = vmatprep.subr.bf16.mxu0 0
        %761 = vmatpush1.bf16.msra.mxu0 %v750
        %762 = vmatprep.subr.bf16.mxu0 0
        %763 = vmatpush1.bf16.msra.mxu0 %v751
        %764 = vmatprep.subr.bf16.mxu0 0
        %765 = vmatpush1.bf16.msra.mxu0 %v752
        %766 = vmatprep.subr.bf16.mxu0 0
        %767 = vmatpush1.bf16.msra.mxu0 %v753
        %768 = vmatprep.subr.bf16.mxu0 0
        %769 = vmatpush1.bf16.msra.mxu0 %v754
        %770 = vmatprep.subr.bf16.mxu0 0
        %771 = vmatpush1.bf16.msra.mxu0 %v755
        %772 = vmatprep.subr.bf16.mxu0 0
        %773 = vmatpush1.bf16.msra.mxu0 0
        %774 = vmatprep.subr.bf16.mxu0 0
        %775 = vmatpush1.bf16.msra.mxu0 0
        %776 = vmatprep.subr.bf16.mxu0 0
        %777 = vmatpush1.bf16.msra.mxu0 0
        %778 = vmatprep.subr.bf16.mxu0 0
        %779 = vmatpush1.bf16.msra.mxu0 0
        %780 = vmatprep.subr.bf16.mxu0 0
        %781 = vmatpush1.bf16.msra.mxu0 0
        %782 = vmatprep.subr.bf16.mxu0 0
        %783 = vmatpush1.bf16.msra.mxu0 0
        %784 = vmatprep.subr.bf16.mxu0 0
        %785 = vmatpush1.bf16.msra.mxu0 0
        %786 = vmatprep.subr.bf16.mxu0 0
        %787 = vmatpush1.bf16.msra.mxu0 0
        %788 = vmatprep.mubr.bf16.mxu0 0
        %789 = vmatmul.mubr.bf16.gmra.mrb[0].mxu0 %v418
        %v790 = vpop.f32.mrb[0].mxu0
        %v791 = vadd.f32 0.0, %v790
        %v792 = vpop.f32.mrb[0].mxu0
        %v793 = vpop.f32.mrb[0].mxu0
        %v794 = vadd.f32 0.0, %v793
        %v795 = vpop.f32.mrb[0].mxu0
        %796 = vmatprep.mubr.bf16.mxu0 0
        %797 = vmatmul.mubr.bf16.gmra.mrb[0].mxu0 %v419
        %v798 = vpop.f32.mrb[0].mxu0
        %v799 = vadd.f32 0.0, %v798
        %v800 = vpop.f32.mrb[0].mxu0
        %v801 = vpop.f32.mrb[0].mxu0
        %v802 = vadd.f32 0.0, %v801
        %v803 = vpop.f32.mrb[0].mxu0
        %804 = vmatprep.mubr.bf16.mxu0 0
        %805 = vmatmul.mubr.bf16.gmra.mrb[0].mxu0 %v420
        %v806 = vpop.f32.mrb[0].mxu0
        %v807 = vadd.f32 0.0, %v806
        %v808 = vpop.f32.mrb[0].mxu0
        %v809 = vpop.f32.mrb[0].mxu0
        %v810 = vadd.f32 0.0, %v809
        %v811 = vpop.f32.mrb[0].mxu0
        %812 = vmatprep.mubr.bf16.mxu0 0
        %813 = vmatmul.mubr.bf16.gmra.mrb[0].mxu0 %v421
        %v814 = vpop.f32.mrb[0].mxu0
        %v815 = vadd.f32 0.0, %v814
        %v816 = vpop.f32.mrb[0].mxu0
        %v817 = vpop.f32.mrb[0].mxu0
        %v818 = vadd.f32 0.0, %v817
        %v819 = vpop.f32.mrb[0].mxu0
        %820 = vmatprep.mubr.bf16.mxu0 0
        %821 = vmatmul.mubr.bf16.gmra.mrb[0].mxu0 %v422
        %v822 = vpop.f32.mrb[0].mxu0
        %v823 = vadd.f32 0.0, %v822
        %v824 = vpop.f32.mrb[0].mxu0
        %v825 = vpop.f32.mrb[0].mxu0
        %v826 = vadd.f32 0.0, %v825
        %v827 = vpop.f32.mrb[0].mxu0
        %828 = vmatprep.mubr.bf16.mxu0 0
        %829 = vmatmul.mubr.bf16.gmra.mrb[0].mxu0 %v423
        %v830 = vpop.f32.mrb[0].mxu0
        %v831 = vadd.f32 0.0, %v830
        %v832 = vpop.f32.mrb[0].mxu0
        %v833 = vpop.f32.mrb[0].mxu0
        %v834 = vadd.f32 0.0, %v833
        %v835 = vpop.f32.mrb[0].mxu0
        %836 = vmatprep.mubr.bf16.mxu0 0
        %837 = vmatmul.mubr.bf16.gmra.mrb[0].mxu0 %v424
        %v838 = vpop.f32.mrb[0].mxu0
        %v839 = vadd.f32 0.0, %v838
        %v840 = vpop.f32.mrb[0].mxu0
        %v841 = vpop.f32.mrb[0].mxu0
        %v842 = vadd.f32 0.0, %v841
        %v843 = vpop.f32.mrb[0].mxu0
        %844 = vmatprep.mubr.bf16.mxu0 0
        %845 = vmatmul.mubr.bf16.gmra.mrb[0].mxu0 %v425
        %v846 = vpop.f32.mrb[0].mxu0
        %v847 = vadd.f32 0.0, %v846
        %v848 = vpop.f32.mrb[0].mxu0
        %v849 = vpop.f32.mrb[0].mxu0
        %v850 = vadd.f32 0.0, %v849
        %v851 = vpop.f32.mrb[0].mxu0
        %852 = vdwg.mxu0
        %v853 = vpack.c.bf16 %v794, %v791
        %v854 = vpack.c.bf16 %v802, %v799
        %v855 = vpack.c.bf16 %v810, %v807
        %v856 = vpack.c.bf16 %v818, %v815
        %v857 = vpack.c.bf16 %v826, %v823
        %v858 = vpack.c.bf16 %v834, %v831
        %v859 = vpack.c.bf16 %v842, %v839
        %v860 = vpack.c.bf16 %v850, %v847
        %s861 = scalar_lea.vmem %s2, 16
        %v862 = vld [vmem:[%s861] sm:$0xf]
        %v863 = vld [vmem:[%s861 + $0x4] sm:$0xf]
        %v864 = vld [vmem:[%s861 + $0x8] sm:$0xf]
        %v865 = vld [vmem:[%s861 + $0xc] sm:$0xf]
        %s866 = scalar_lea.vmem %s3, 1
        %v867 = vld [vmem:[%s866] sm:$0x1]
        %v869 = vlaneseq
        %v870 = vshrl.u32 %v869, 7
        %v871 = vsub.s32 0, %v870
        %v872 = vrot.slane %v867, %v871
        %v878 = vunpack.c.l.b16 %v862
        %v879 = vunpack.c.l.b16 %v863
        %v880 = vunpack.c.l.b16 %v864
        %v881 = vunpack.c.l.b16 %v865
        %v882 = vpack.c.b16 %v879, %v878
        %v883 = vpack.c.b16 %v881, %v880
        %v887 = vsel %vm610, %v853, 0
        %v890 = vsel %vm610, %v854, 0
        %v893 = vsel %vm610, %v855, 0
        %v896 = vsel %vm610, %v856, 0
        %v899 = vsel %vm610, %v857, 0
        %v902 = vsel %vm610, %v858, 0
        %v905 = vsel %vm610, %v859, 0
        %v908 = vsel %vm610, %v860, 0
        %910 = vmatprep.subr.bf16.mxu0 0
        %911 = vmatpush1.bf16.msra.mxu0 %v882
        %912 = vmatprep.subr.bf16.mxu0 0
        %913 = vmatpush1.bf16.msra.mxu0 %v883
        %914 = vmatprep.subr.bf16.mxu0 0
        %915 = vmatpush1.bf16.msra.mxu0 0
        %916 = vmatprep.subr.bf16.mxu0 0
        %917 = vmatpush1.bf16.msra.mxu0 0
        %918 = vmatprep.subr.bf16.mxu0 0
        %919 = vmatpush1.bf16.msra.mxu0 0
        %920 = vmatprep.subr.bf16.mxu0 0
        %921 = vmatpush1.bf16.msra.mxu0 0
        %922 = vmatprep.subr.bf16.mxu0 0
        %923 = vmatpush1.bf16.msra.mxu0 0
        %924 = vmatprep.subr.bf16.mxu0 0
        %925 = vmatpush1.bf16.msra.mxu0 0
        %926 = vmatprep.subr.bf16.mxu0 0
        %927 = vmatpush1.bf16.msra.mxu0 0
        %928 = vmatprep.subr.bf16.mxu0 0
        %929 = vmatpush1.bf16.msra.mxu0 0
        %930 = vmatprep.subr.bf16.mxu0 0
        %931 = vmatpush1.bf16.msra.mxu0 0
        %932 = vmatprep.subr.bf16.mxu0 0
        %933 = vmatpush1.bf16.msra.mxu0 0
        %934 = vmatprep.subr.bf16.mxu0 0
        %935 = vmatpush1.bf16.msra.mxu0 0
        %936 = vmatprep.subr.bf16.mxu0 0
        %937 = vmatpush1.bf16.msra.mxu0 0
        %938 = vmatprep.subr.bf16.mxu0 0
        %939 = vmatpush1.bf16.msra.mxu0 0
        %940 = vmatprep.subr.bf16.mxu0 0
        %941 = vmatpush1.bf16.msra.mxu0 0
        %942 = vmatprep.mubr.bf16.mxu0 0
        %943 = vmatmul.mubr.bf16.gmra.mrb[0].mxu0 %v887
        %v944 = vpop.f32.mrb[0].mxu0
        %v945 = vadd.f32 %v872, %v944
        %v946 = vpop.f32.mrb[0].mxu0
        %v947 = vpop.f32.mrb[0].mxu0
        %v948 = vadd.f32 %v872, %v947
        %v949 = vpop.f32.mrb[0].mxu0
        %950 = vmatprep.mubr.bf16.mxu0 0
        %951 = vmatmul.mubr.bf16.gmra.mrb[0].mxu0 %v890
        %v952 = vpop.f32.mrb[0].mxu0
        %v953 = vadd.f32 %v872, %v952
        %v954 = vpop.f32.mrb[0].mxu0
        %v955 = vpop.f32.mrb[0].mxu0
        %v956 = vadd.f32 %v872, %v955
        %v957 = vpop.f32.mrb[0].mxu0
        %958 = vmatprep.mubr.bf16.mxu0 0
        %959 = vmatmul.mubr.bf16.gmra.mrb[0].mxu0 %v893
        %v960 = vpop.f32.mrb[0].mxu0
        %v961 = vadd.f32 %v872, %v960
        %v962 = vpop.f32.mrb[0].mxu0
        %v963 = vpop.f32.mrb[0].mxu0
        %v964 = vadd.f32 %v872, %v963
        %v965 = vpop.f32.mrb[0].mxu0
        %966 = vmatprep.mubr.bf16.mxu0 0
        %967 = vmatmul.mubr.bf16.gmra.mrb[0].mxu0 %v896
        %v968 = vpop.f32.mrb[0].mxu0
        %v969 = vadd.f32 %v872, %v968
        %v970 = vpop.f32.mrb[0].mxu0
        %v971 = vpop.f32.mrb[0].mxu0
        %v972 = vadd.f32 %v872, %v971
        %v973 = vpop.f32.mrb[0].mxu0
        %974 = vmatprep.mubr.bf16.mxu0 0
        %975 = vmatmul.mubr.bf16.gmra.mrb[0].mxu0 %v899
        %v976 = vpop.f32.mrb[0].mxu0
        %v977 = vadd.f32 %v872, %v976
        %v978 = vpop.f32.mrb[0].mxu0
        %v979 = vpop.f32.mrb[0].mxu0
        %v980 = vadd.f32 %v872, %v979
        %v981 = vpop.f32.mrb[0].mxu0
        %982 = vmatprep.mubr.bf16.mxu0 0
        %983 = vmatmul.mubr.bf16.gmra.mrb[0].mxu0 %v902
        %v984 = vpop.f32.mrb[0].mxu0
        %v985 = vadd.f32 %v872, %v984
        %v986 = vpop.f32.mrb[0].mxu0
        %v987 = vpop.f32.mrb[0].mxu0
        %v988 = vadd.f32 %v872, %v987
        %v989 = vpop.f32.mrb[0].mxu0
        %990 = vmatprep.mubr.bf16.mxu0 0
        %991 = vmatmul.mubr.bf16.gmra.mrb[0].mxu0 %v905
        %v992 = vpop.f32.mrb[0].mxu0
        %v993 = vadd.f32 %v872, %v992
        %v994 = vpop.f32.mrb[0].mxu0
        %v995 = vpop.f32.mrb[0].mxu0
        %v996 = vadd.f32 %v872, %v995
        %v997 = vpop.f32.mrb[0].mxu0
        %998 = vmatprep.mubr.bf16.mxu0 0
        %999 = vmatmul.mubr.bf16.gmra.mrb[0].mxu0 %v908
        %v1000 = vpop.f32.mrb[0].mxu0
        %v1001 = vadd.f32 %v872, %v1000
        %v1002 = vpop.f32.mrb[0].mxu0
        %v1003 = vpop.f32.mrb[0].mxu0
        %v1004 = vadd.f32 %v872, %v1003
        %v1005 = vpop.f32.mrb[0].mxu0
        %1006 = vdwg.mxu0
        %v1007 = vld [vmem:[%s4] sm:$0xff]
        %1008 = vmatprep.subr.mxu0 0.0
        %1009 = vmatpush1.msra.mxu0 %v945
        %1010 = vmatprep.subr.mxu0 0.0
        %1011 = vmatpush1.msra.mxu0 %v948
        %1012 = vmatprep.subr.mxu0 0.0
        %1013 = vmatpush1.msra.mxu0 %v953
        %1014 = vmatprep.subr.mxu0 0.0
        %1015 = vmatpush1.msra.mxu0 %v956
        %1016 = vmatprep.subr.mxu0 0.0
        %1017 = vmatpush1.msra.mxu0 %v961
        %1018 = vmatprep.subr.mxu0 0.0
        %1019 = vmatpush1.msra.mxu0 %v964
        %1020 = vmatprep.subr.mxu0 0.0
        %1021 = vmatpush1.msra.mxu0 %v969
        %1022 = vmatprep.subr.mxu0 0.0
        %1023 = vmatpush1.msra.mxu0 %v972
        %1024 = vmatprep.subr.mxu0 0.0
        %1025 = vmatpush1.msra.mxu0 %v977
        %1026 = vmatprep.subr.mxu0 0.0
        %1027 = vmatpush1.msra.mxu0 %v980
        %1028 = vmatprep.subr.mxu0 0.0
        %1029 = vmatpush1.msra.mxu0 %v985
        %1030 = vmatprep.subr.mxu0 0.0
        %1031 = vmatpush1.msra.mxu0 %v988
        %1032 = vmatprep.subr.mxu0 0.0
        %1033 = vmatpush1.msra.mxu0 %v993
        %1034 = vmatprep.subr.mxu0 0.0
        %1035 = vmatpush1.msra.mxu0 %v996
        %1036 = vmatprep.subr.mxu0 0.0
        %1037 = vmatpush1.msra.mxu0 %v1001
        %1038 = vmatprep.subr.mxu0 0.0
        %1039 = vmatpush1.msra.mxu0 %v1004
        %1040 = vmatprep.subr.mxu0 0.0
        %1041 = vmatpush1.msra.mxu0 0.0
        %1042 = vmatprep.subr.mxu0 0.0
        %1043 = vmatpush1.msra.mxu0 0.0
        %1044 = vmatprep.subr.mxu0 0.0
        %1045 = vmatpush1.msra.mxu0 0.0
        %1046 = vmatprep.subr.mxu0 0.0
        %1047 = vmatpush1.msra.mxu0 0.0
        %1048 = vmatprep.subr.mxu0 0.0
        %1049 = vmatpush1.msra.mxu0 0.0
        %1050 = vmatprep.subr.mxu0 0.0
        %1051 = vmatpush1.msra.mxu0 0.0
        %1052 = vmatprep.subr.mxu0 0.0
        %1053 = vmatpush1.msra.mxu0 0.0
        %1054 = vmatprep.subr.mxu0 0.0
        %1055 = vmatpush1.msra.mxu0 0.0
        %1056 = vmatprep.subr.mxu0 0.0
        %1057 = vmatpush1.msra.mxu0 0.0
        %1058 = vmatprep.subr.mxu0 0.0
        %1059 = vmatpush1.msra.mxu0 0.0
        %1060 = vmatprep.subr.mxu0 0.0
        %1061 = vmatpush1.msra.mxu0 0.0
        %1062 = vmatprep.subr.mxu0 0.0
        %1063 = vmatpush1.msra.mxu0 0.0
        %1064 = vmatprep.subr.mxu0 0.0
        %1065 = vmatpush1.msra.mxu0 0.0
        %1066 = vmatprep.subr.mxu0 0.0
        %1067 = vmatpush1.msra.mxu0 0.0
        %1068 = vmatprep.subr.mxu0 0.0
        %1069 = vmatpush1.msra.mxu0 0.0
        %1070 = vmatprep.subr.mxu0 0.0
        %1071 = vmatpush1.msra.mxu0 0.0
        %1072 = vmatprep.mubr.f32.mxu0 0.0
        %1073 = vmatmul.mubr.f32.gmra.mrb[0].mxu0 %v1007
        %v1074 = vpop.f32.mrb[0].mxu0
        %v1075 = vadd.f32 0.0, %v1074
        %v1076 = vpop.f32.mrb[0].mxu0
        %1077 = vdwg.mxu0
        %v1078 = vld [vmem:[%s5] sm:$0xff]
        %v1079 = vld [vmem:[%s5 + $0x8] sm:$0xff]
        %v1080 = vld [vmem:[%s5 + $0x10] sm:$0xff]
        %v1081 = vld [vmem:[%s5 + $0x18] sm:$0xff]
        %v1082 = vld [vmem:[%s6] sm:$0x1]
        %v1084 = vlaneseq
        %v1085 = vshrl.u32 %v1084, 7
        %v1086 = vsub.s32 0, %v1085
        %v1087 = vrot.slane %v1082, %v1086
        %v1090 = vsel %vm610, %v1075, 0
        %1092 = vmatprep.subr.mxu0 0.0
        %1093 = vmatpush1.msra.mxu0 %v1078
        %1094 = vmatprep.subr.mxu0 0.0
        %1095 = vmatpush1.msra.mxu0 %v1079
        %1096 = vmatprep.subr.mxu0 0.0
        %1097 = vmatpush1.msra.mxu0 %v1080
        %1098 = vmatprep.subr.mxu0 0.0
        %1099 = vmatpush1.msra.mxu0 %v1081
        %1100 = vmatprep.subr.mxu0 0.0
        %1101 = vmatpush1.msra.mxu0 0.0
        %1102 = vmatprep.subr.mxu0 0.0
        %1103 = vmatpush1.msra.mxu0 0.0
        %1104 = vmatprep.subr.mxu0 0.0
        %1105 = vmatpush1.msra.mxu0 0.0
        %1106 = vmatprep.subr.mxu0 0.0
        %1107 = vmatpush1.msra.mxu0 0.0
        %1108 = vmatprep.subr.mxu0 0.0
        %1109 = vmatpush1.msra.mxu0 0.0
        %1110 = vmatprep.subr.mxu0 0.0
        %1111 = vmatpush1.msra.mxu0 0.0
        %1112 = vmatprep.subr.mxu0 0.0
        %1113 = vmatpush1.msra.mxu0 0.0
        %1114 = vmatprep.subr.mxu0 0.0
        %1115 = vmatpush1.msra.mxu0 0.0
        %1116 = vmatprep.subr.mxu0 0.0
        %1117 = vmatpush1.msra.mxu0 0.0
        %1118 = vmatprep.subr.mxu0 0.0
        %1119 = vmatpush1.msra.mxu0 0.0
        %1120 = vmatprep.subr.mxu0 0.0
        %1121 = vmatpush1.msra.mxu0 0.0
        %1122 = vmatprep.subr.mxu0 0.0
        %1123 = vmatpush1.msra.mxu0 0.0
        %1124 = vmatprep.subr.mxu0 0.0
        %1125 = vmatpush1.msra.mxu0 0.0
        %1126 = vmatprep.subr.mxu0 0.0
        %1127 = vmatpush1.msra.mxu0 0.0
        %1128 = vmatprep.subr.mxu0 0.0
        %1129 = vmatpush1.msra.mxu0 0.0
        %1130 = vmatprep.subr.mxu0 0.0
        %1131 = vmatpush1.msra.mxu0 0.0
        %1132 = vmatprep.subr.mxu0 0.0
        %1133 = vmatpush1.msra.mxu0 0.0
        %1134 = vmatprep.subr.mxu0 0.0
        %1135 = vmatpush1.msra.mxu0 0.0
        %1136 = vmatprep.subr.mxu0 0.0
        %1137 = vmatpush1.msra.mxu0 0.0
        %1138 = vmatprep.subr.mxu0 0.0
        %1139 = vmatpush1.msra.mxu0 0.0
        %1140 = vmatprep.subr.mxu0 0.0
        %1141 = vmatpush1.msra.mxu0 0.0
        %1142 = vmatprep.subr.mxu0 0.0
        %1143 = vmatpush1.msra.mxu0 0.0
        %1144 = vmatprep.subr.mxu0 0.0
        %1145 = vmatpush1.msra.mxu0 0.0
        %1146 = vmatprep.subr.mxu0 0.0
        %1147 = vmatpush1.msra.mxu0 0.0
        %1148 = vmatprep.subr.mxu0 0.0
        %1149 = vmatpush1.msra.mxu0 0.0
        %1150 = vmatprep.subr.mxu0 0.0
        %1151 = vmatpush1.msra.mxu0 0.0
        %1152 = vmatprep.subr.mxu0 0.0
        %1153 = vmatpush1.msra.mxu0 0.0
        %1154 = vmatprep.subr.mxu0 0.0
        %1155 = vmatpush1.msra.mxu0 0.0
        %1156 = vmatprep.mubr.f32.mxu0 0.0
        %1157 = vmatmul.mubr.f32.gmra.mrb[0].mxu0 %v1090
        %v1158 = vpop.f32.mrb[0].mxu0
        %v1159 = vadd.f32 %v1087, %v1158
        %v1160 = vpop.f32.mrb[0].mxu0
        %1161 = vdwg.mxu0
        %v1162 = vmax.f32 %v1159, 0.0
        %v1163 = vld [vmem:[%s7] sm:$0xff]
        %v1164 = vld [vmem:[%s7 + $0x8] sm:$0xff]
        %v1165 = vld [vmem:[%s7 + $0x10] sm:$0xff]
        %v1166 = vld [vmem:[%s7 + $0x18] sm:$0xff]
        %v1167 = vld [vmem:[#allocation2] sm:$0x1]
        %v1169 = vlaneseq
        %v1170 = vshrl.u32 %v1169, 7
        %v1171 = vsub.s32 0, %v1170
        %v1172 = vrot.slane %v1167, %v1171
        %v1175 = vsel %vm610, %v1162, 0
        %1177 = vmatprep.subr.mxu0 0.0
        %1178 = vmatpush1.msra.mxu0 %v1163
        %1179 = vmatprep.subr.mxu0 0.0
        %1180 = vmatpush1.msra.mxu0 %v1164
        %1181 = vmatprep.subr.mxu0 0.0
        %1182 = vmatpush1.msra.mxu0 %v1165
        %1183 = vmatprep.subr.mxu0 0.0
        %1184 = vmatpush1.msra.mxu0 %v1166
        %1185 = vmatprep.subr.mxu0 0.0
        %1186 = vmatpush1.msra.mxu0 0.0
        %1187 = vmatprep.subr.mxu0 0.0
        %1188 = vmatpush1.msra.mxu0 0.0
        %1189 = vmatprep.subr.mxu0 0.0
        %1190 = vmatpush1.msra.mxu0 0.0
        %1191 = vmatprep.subr.mxu0 0.0
        %1192 = vmatpush1.msra.mxu0 0.0
        %1193 = vmatprep.subr.mxu0 0.0
        %1194 = vmatpush1.msra.mxu0 0.0
        %1195 = vmatprep.subr.mxu0 0.0
        %1196 = vmatpush1.msra.mxu0 0.0
        %1197 = vmatprep.subr.mxu0 0.0
        %1198 = vmatpush1.msra.mxu0 0.0
        %1199 = vmatprep.subr.mxu0 0.0
        %1200 = vmatpush1.msra.mxu0 0.0
        %1201 = vmatprep.subr.mxu0 0.0
        %1202 = vmatpush1.msra.mxu0 0.0
        %1203 = vmatprep.subr.mxu0 0.0
        %1204 = vmatpush1.msra.mxu0 0.0
        %1205 = vmatprep.subr.mxu0 0.0
        %1206 = vmatpush1.msra.mxu0 0.0
        %1207 = vmatprep.subr.mxu0 0.0
        %1208 = vmatpush1.msra.mxu0 0.0
        %1209 = vmatprep.subr.mxu0 0.0
        %1210 = vmatpush1.msra.mxu0 0.0
        %1211 = vmatprep.subr.mxu0 0.0
        %1212 = vmatpush1.msra.mxu0 0.0
        %1213 = vmatprep.subr.mxu0 0.0
        %1214 = vmatpush1.msra.mxu0 0.0
        %1215 = vmatprep.subr.mxu0 0.0
        %1216 = vmatpush1.msra.mxu0 0.0
        %1217 = vmatprep.subr.mxu0 0.0
        %1218 = vmatpush1.msra.mxu0 0.0
        %1219 = vmatprep.subr.mxu0 0.0
        %1220 = vmatpush1.msra.mxu0 0.0
        %1221 = vmatprep.subr.mxu0 0.0
        %1222 = vmatpush1.msra.mxu0 0.0
        %1223 = vmatprep.subr.mxu0 0.0
        %1224 = vmatpush1.msra.mxu0 0.0
        %1225 = vmatprep.subr.mxu0 0.0
        %1226 = vmatpush1.msra.mxu0 0.0
        %1227 = vmatprep.subr.mxu0 0.0
        %1228 = vmatpush1.msra.mxu0 0.0
        %1229 = vmatprep.subr.mxu0 0.0
        %1230 = vmatpush1.msra.mxu0 0.0
        %1231 = vmatprep.subr.mxu0 0.0
        %1232 = vmatpush1.msra.mxu0 0.0
        %1233 = vmatprep.subr.mxu0 0.0
        %1234 = vmatpush1.msra.mxu0 0.0
        %1235 = vmatprep.subr.mxu0 0.0
        %1236 = vmatpush1.msra.mxu0 0.0
        %1237 = vmatprep.subr.mxu0 0.0
        %1238 = vmatpush1.msra.mxu0 0.0
        %1239 = vmatprep.subr.mxu0 0.0
        %1240 = vmatpush1.msra.mxu0 0.0
        %1241 = vmatprep.mubr.f32.mxu0 0.0
        %1242 = vmatmul.mubr.f32.gmra.mrb[0].mxu0 %v1175
        %v1243 = vpop.f32.mrb[0].mxu0
        %v1244 = vadd.f32 %v1172, %v1243
        %v1245 = vpop.f32.mrb[0].mxu0
        %1246 = vdwg.mxu0
        %1248 = vset.pattern.permute.xlu0 0
        %1249 = vperm.xlu0 %1248, %v1244
        %v1250 = vpop.permute.xlu0 %1249
        %1252 = vst [vmem:[%s342] sm:$0xff] %v1250
        %s1253 = sand.u32 %s232, 1
        %s1254 = scalar_lea.sflag [#allocation4], %s1253
        %s1255 = sand.u32 %s232, 1
        %s1256 = smul.addr %s1255, 8
        %s1257 = scalar_lea.vmem [#allocation3], %s1256
        // Predicated region
        $region57: #{tpu_custom_call.1} parent=55 // pred_check
          %p1258 = pneg %p242
        $region58: #{tpu_custom_call.1} parent=55 // pred_check_branch
          %1260 = sbr.rel (%p1258) target = $region60
        $region59: #{tpu_custom_call.1} parent=55 // pred_region
          %s1262 = ssub.s32 128, 128
          %1263 = vsyncadd %s1254, %s1262
          %s1264 = smul.addr %s25, 128
          %s1265 = scalar_lea.hbm %s9, %s1264
          %s1267 = sshll.u32 %s1257, 4
          %s1268 = int_to_ptr.vmem [resolvable:$true] %s1267
          %1270 = dma.vmem_to_hbm [thread:$0]  %s1268, 128, %s1265, %s1254
        $region60: #{tpu_custom_call.1} parent=55 // pred_fallthru
          _
      $region56: #{tpu_custom_call.1} parent=5 // pred_fallthru
        _
      %p1271 = scmp.le.s32.totalorder 2, %s20
      // Predicated region
      $region61: #{tpu_custom_call.1} parent=5 // pred_check
        %p1272 = pneg %p1271
      $region62: #{tpu_custom_call.1} parent=5 // pred_check_branch
        %1274 = sbr.rel (%p1272) target = $region64
      $region63: #{tpu_custom_call.1} parent=5 // pred_region
        %s1275 = ssub.s32 %s20, 2
        // Predicated region
        $region65: #{tpu_custom_call.1} parent=63 // pred_check
          %p1276 = pneg %p248
        $region66: #{tpu_custom_call.1} parent=63 // pred_check_branch
          %1278 = sbr.rel (%p1276) target = $region68
        $region67: #{tpu_custom_call.1} parent=63 // pred_region
          %s1279 = sand.u32 %s233, 1
          %s1280 = scalar_lea.sflag [#allocation4], %s1279
          %s1281 = sand.u32 %s233, 1
          %s1282 = smul.addr %s1281, 8
          %s1283 = scalar_lea.vmem [#allocation3], %s1282
          %1284 = dma.done %s1280, 128
        $region68: #{tpu_custom_call.1} parent=63 // pred_fallthru
          _
      $region64: #{tpu_custom_call.1} parent=5 // pred_fallthru
        _
    $region6: #{tpu_custom_call.1} parent=1 // loop_footer
      %s24 = sadd.s32 1, %s20
    $region7: #{tpu_custom_call.1} parent=1 // loop_footer_branch
      %19 = sbr.rel target = $region3
    $region8: #{tpu_custom_call.1} parent=1 // loop_exit
      _
    %1285 = vsyncpa [#allocation4], 1
    %s1286 = scalar_lea.sflag [#allocation4], 1
    %1287 = vsyncpa %s1286, 1

</llo_original>
